<compile_context>
chip_gen: v6e
topology: v6e:2x2x1
jax: 0.10.0
libtpu: 0.0.40
codegen_flags: <defaults>
</compile_context>

<pallas_src>
import math

import jax
import jax.numpy as jnp
from jax.experimental import pallas as pl
from jax.experimental.pallas import tpu as pltpu


# ---------------------------------------------------------------------------
# Helpers
# ---------------------------------------------------------------------------
def _round_up(x, m):
    return ((x + m - 1) // m) * m


def _choose_tile_and_pad(dim, unit, cap):
    """Largest tile (multiple of `unit`, <= cap) whose padded dim wastes at
    most 12.5% over round_up(dim, unit).  Returns (tile, padded_dim)."""
    base = _round_up(dim, unit)
    best_t, best_pad = unit, base
    t = unit
    limit = min(cap, base)
    while t <= limit:
        padded = _round_up(dim, t)
        if padded * 8 <= base * 9:          # <= 12.5% padding waste
            best_t, best_pad = t, padded
        t += unit
    return best_t, best_pad


# ---------------------------------------------------------------------------
# Kernels.  Grid = (M tiles, N tiles, K tiles), K innermost ("arbitrary").
# Outputs accumulate in place; bias written exactly once at k == 0.
# ---------------------------------------------------------------------------
def _clinear_real_kernel(x_ref, wr_ref, wi_ref, br_ref, bi_ref,
                         yr_ref, yi_ref):
    @pl.when(pl.program_id(2) == 0)
    def _init():
        yr_ref[...] = jnp.broadcast_to(br_ref[...], yr_ref.shape)
        yi_ref[...] = jnp.broadcast_to(bi_ref[...], yi_ref.shape)

    x = x_ref[...]
    yr_ref[...] += jnp.dot(x, wr_ref[...], preferred_element_type=jnp.float32)
    yi_ref[...] += jnp.dot(x, wi_ref[...], preferred_element_type=jnp.float32)


def _clinear_cplx_kernel(xr_ref, xi_ref, wr_ref, wmr_ref, wpr_ref,
                         br_ref, bi_ref, yr_ref, yi_ref):
    # Gauss / Karatsuba complex multiply (3 matmuls instead of 4):
    #   k1 = (xr+xi)@wr, k2 = xr@(wi-wr), k3 = xi@(wr+wi)
    #   yr = k1 - k3,    yi = k1 + k2
    @pl.when(pl.program_id(2) == 0)
    def _init():
        yr_ref[...] = jnp.broadcast_to(br_ref[...], yr_ref.shape)
        yi_ref[...] = jnp.broadcast_to(bi_ref[...], yi_ref.shape)

    xr = xr_ref[...]
    xi = xi_ref[...]
    k1 = jnp.dot(xr + xi, wr_ref[...], preferred_element_type=jnp.float32)
    k2 = jnp.dot(xr, wmr_ref[...], preferred_element_type=jnp.float32)
    k3 = jnp.dot(xi, wpr_ref[...], preferred_element_type=jnp.float32)
    yr_ref[...] += k1 - k3
    yi_ref[...] += k1 + k2


def _launch(kernel, x_planes, w_planes, biases, Mp, Np, Kp, tm, tn, tk,
            flops, bytes_accessed):
    assert Mp % tm == 0 and Np % tn == 0 and Kp % tk == 0, \
        "padded dims must be divisible by their tiles"
    grid = (Mp // tm, Np // tn, Kp // tk)

    x_spec = pl.BlockSpec((tm, tk), lambda i, j, k: (i, k))
    w_spec = pl.BlockSpec((tk, tn), lambda i, j, k: (k, j))
    b_spec = pl.BlockSpec((1, tn), lambda i, j, k: (0, j))
    out_spec = pl.BlockSpec((tm, tn), lambda i, j, k: (i, j))

    # VMEM budget: double-buffered bf16 input tiles + the two f32 output
    # accumulator tiles (also double-buffered).  Clamp well below v7x's
    # 64 MiB physical VMEM per TensorCore.
    est = (len(x_planes) * 2 * tm * tk * 2
           + len(w_planes) * 2 * tk * tn * 2
           + len(biases) * 2 * tn * 4
           + 2 * 2 * tm * tn * 4)
    vmem_limit = max(16 << 20, min(int(est * 3 // 2) + (4 << 20), 56 << 20))

    return pl.pallas_call(
        kernel,
        out_shape=(jax.ShapeDtypeStruct((Mp, Np), jnp.float32),
                   jax.ShapeDtypeStruct((Mp, Np), jnp.float32)),
        grid_spec=pltpu.PrefetchScalarGridSpec(
            num_scalar_prefetch=0,
            grid=grid,
            in_specs=([x_spec] * len(x_planes) + [w_spec] * len(w_planes)
                      + [b_spec] * len(biases)),
            out_specs=[out_spec, out_spec],
        ),
        compiler_params=pltpu.CompilerParams(
            dimension_semantics=("parallel", "parallel", "arbitrary"),
            vmem_limit_bytes=vmem_limit),
        cost_estimate=pl.CostEstimate(flops=flops, transcendentals=0,
                                      bytes_accessed=bytes_accessed),
    )(*x_planes, *w_planes, *biases)


# ---------------------------------------------------------------------------
# One-time parameter packing (hoisted out of the forward pass).
# ---------------------------------------------------------------------------
def prepare_clinear_params(weight, bias, compute_dtype=jnp.bfloat16,
                           tk_cap=1024, tn_cap=1024):
    """Pack the complex weight/bias into MXU-friendly padded planes.

    weight: (out_features, in_features) complex64
    bias:   (1, out_features)           complex64
    Padding is done up to the chosen tile sizes so the large-tile config is
    always reachable.  For bit-closer parity with a true complex64 layer,
    pass compute_dtype=jnp.float32.
    """
    N, K = weight.shape
    tk, Kp = _choose_tile_and_pad(K, 128, tk_cap)
    tn, Np = _choose_tile_and_pad(N, 128, tn_cap)

    wt = weight.T                                                   # (K, N)
    wr = jnp.pad(jnp.real(wt).astype(jnp.float32), ((0, Kp - K), (0, Np - N)))
    wi = jnp.pad(jnp.imag(wt).astype(jnp.float32), ((0, Kp - K), (0, Np - N)))

    # Real-input path planes + Gauss planes for the complex-input path.
    w_r = wr.astype(compute_dtype)            # shared: real path & Gauss k1
    w_i = wi.astype(compute_dtype)            # real path
    w_mr = (wi - wr).astype(compute_dtype)    # Gauss k2
    w_pr = (wr + wi).astype(compute_dtype)    # Gauss k3

    b_r = jnp.pad(jnp.real(bias).astype(jnp.float32), ((0, 0), (0, Np - N)))
    b_i = jnp.pad(jnp.imag(bias).astype(jnp.float32), ((0, 0), (0, Np - N)))

    # TODO(synk): optional int8 (v5e/v6e) / fp8 (v7x) weight planes with
    # per-column scales for weight-bandwidth-bound small-batch calls.
    return dict(w_r=w_r, w_i=w_i, w_mr=w_mr, w_pr=w_pr, b_r=b_r, b_i=b_i,
                in_features=K, out_features=N, k_pad=Kp, n_pad=Np,
                tk=tk, tn=tn, compute_dtype=compute_dtype)


def clinear_forward(x, params, tm_cap=256, return_planar=False):
    """x: (B, in_features) real or complex.

    Returns (B, out_features) complex64, or the planar (yr, yi) f32 pair when
    return_planar=True (skips the final complex-pack HBM round trip)."""
    B, K = x.shape
    assert K == params["in_features"], "input feature size mismatch"
    cd = params["compute_dtype"]
    Kp, Np, N = params["k_pad"], params["n_pad"], params["out_features"]
    tk, tn = params["tk"], params["tn"]

    # M padded to a multiple of 16 so bf16 LHS vregs ([16,128]) are fully packed.
    tm, Mp = _choose_tile_and_pad(B, 16, tm_cap)

    # Give v7x's two TensorCores at least two parallel (i, j) tiles when the
    # problem is big enough to split.
    if (Mp // tm) * (Np // tn) < 2:
        if tn >= 256:
            tn //= 2
        elif tm >= 32:
            tm //= 2

    pad_mk = ((0, Mp - B), (0, Kp - K))
    if jnp.issubdtype(x.dtype, jnp.complexfloating):
        # Two separate planes (no (Mp, 2Kp) concat materialization); cast to
        # the compute dtype BEFORE padding to minimize wrapper HBM traffic.
        xr = jnp.pad(jnp.real(x).astype(cd), pad_mk)
        xi = jnp.pad(jnp.imag(x).astype(cd), pad_mk)
        flops = 3 * 2 * Mp * Kp * Np
        bytes_accessed = ((2 * Mp * Kp + 3 * Kp * Np) * 2 + 2 * Np * 4
                          + 2 * Mp * Np * 4)
        yr, yi = _launch(_clinear_cplx_kernel,
                         (xr, xi),
                         (params["w_r"], params["w_mr"], params["w_pr"]),
                         (params["b_r"], params["b_i"]),
                         Mp, Np, Kp, tm, tn, tk, flops, bytes_accessed)
    else:
        # Purely real input: skip every imaginary-input product
        # (half the MXU FLOPs and input HBM traffic).
        xp = jnp.pad(x.astype(cd), pad_mk)
        flops = 2 * 2 * Mp * Kp * Np
        bytes_accessed = ((Mp * Kp + 2 * Kp * Np) * 2 + 2 * Np * 4
                          + 2 * Mp * Np * 4)
        yr, yi = _launch(_clinear_real_kernel,
                         (xp,),
                         (params["w_r"], params["w_i"]),
                         (params["b_r"], params["b_i"]),
                         Mp, Np, Kp, tm, tn, tk, flops, bytes_accessed)

    yr = yr[:B, :N]
    yi = yi[:B, :N]
    if return_planar:
        return yr, yi
    return jax.lax.complex(yr, yi)


def make_params(key, in_features, out_features):
    """Deterministic xavier-uniform-ish init for complex weight and bias."""
    kwr, kwi, kbr, kbi = jax.random.split(key, 4)
    w_bound = math.sqrt(6.0 / (in_features + out_features))
    b_bound = math.sqrt(6.0 / (1 + out_features))
    wr = jax.random.uniform(kwr, (out_features, in_features), jnp.float32,
                            -w_bound, w_bound)
    wi = jax.random.uniform(kwi, (out_features, in_features), jnp.float32,
                            -w_bound, w_bound)
    br = jax.random.uniform(kbr, (1, out_features), jnp.float32,
                            -b_bound, b_bound)
    bi = jax.random.uniform(kbi, (1, out_features), jnp.float32,
                            -b_bound, b_bound)
    return jax.lax.complex(wr, wi), jax.lax.complex(br, bi)


if __name__ == "__main__":
    key = jax.random.PRNGKey(0)
    kx, kp, kp2 = jax.random.split(key, 3)

    # ---- test 1: real-valued input (real fast path), small shapes ----
    B, IN, OUT = 8, 32, 32
    weight, bias = make_params(kp, IN, OUT)
    params = prepare_clinear_params(weight, bias)      # one-time packing

    x = jax.random.normal(kx, (B, IN), jnp.float32)
    y = jax.block_until_ready(clinear_forward(x, params))

    x_c = jax.lax.complex(x, jnp.zeros_like(x))
    y_ref = jnp.matmul(x_c, weight.T) + bias
    assert y.shape == (B, OUT) and y.dtype == jnp.complex64
    # bf16 inputs, f32 accumulation -> loosened tolerance vs pure-f32 ref.
    assert jnp.allclose(y, y_ref, atol=5e-2, rtol=5e-2), \
        float(jnp.max(jnp.abs(y - y_ref)))

    # ---- test 2: complex-valued input (Gauss 3-matmul path) ----
    kxr, kxi = jax.random.split(kx)
    xc = jax.lax.complex(jax.random.normal(kxr, (B, IN), jnp.float32),
                         jax.random.normal(kxi, (B, IN), jnp.float32))
    yc = jax.block_until_ready(clinear_forward(xc, params))
    yc_ref = jnp.matmul(xc, weight.T) + bias
    assert jnp.allclose(yc, yc_ref, atol=5e-2, rtol=5e-2), \
        float(jnp.max(jnp.abs(yc - yc_ref)))

    # ---- test 3: multi-tile grid (exercises K accumulation + N tiling) ----
    B2, IN2, OUT2 = 8, 256, 256
    weight2, bias2 = make_params(kp2, IN2, OUT2)
    params2 = prepare_clinear_params(weight2, bias2, tk_cap=128, tn_cap=128)
    kxr2, kxi2 = jax.random.split(kp2)
    xc2 = jax.lax.complex(jax.random.normal(kxr2, (B2, IN2), jnp.float32),
                          jax.random.normal(kxi2, (B2, IN2), jnp.float32))
    yc2 = jax.block_until_ready(clinear_forward(xc2, params2))
    yc2_ref = jnp.matmul(xc2, weight2.T) + bias2
    assert yc2.shape == (B2, OUT2) and yc2.dtype == jnp.complex64
    assert jnp.allclose(yc2, yc2_ref, atol=5e-2, rtol=5e-2), \
        float(jnp.max(jnp.abs(yc2 - yc2_ref)))

    print("KERNEL_OK")
</pallas_src>

<mosaic_0001>
module attributes {stable_mosaic.version = 11 : i64} {
  func.func @_clinear_real_kernel(%arg0: i32, %arg1: i32, %arg2: i32, %arg3: memref<16x128xbf16, #tpu.memory_space<vmem>>, %arg4: memref<128x128xbf16, #tpu.memory_space<vmem>>, %arg5: memref<128x128xbf16, #tpu.memory_space<vmem>>, %arg6: memref<1x128xf32, #tpu.memory_space<vmem>>, %arg7: memref<1x128xf32, #tpu.memory_space<vmem>>, %arg8: memref<16x128xf32, #tpu.memory_space<vmem>>, %arg9: memref<16x128xf32, #tpu.memory_space<vmem>>) attributes {dimension_semantics = [#tpu.dimension_semantics<parallel>, #tpu.dimension_semantics<parallel>, #tpu.dimension_semantics<arbitrary>], iteration_bounds = array<i64: 1, 1, 1>, scalar_prefetch = 0 : i64, scratch_operands = 0 : i64, tpu.core_type = #tpu.core_type<tc>, window_params = [{transform_indices = @transform_0, window_bounds = array<i64: 16, 128>}, {transform_indices = @transform_1, window_bounds = array<i64: 128, 128>}, {transform_indices = @transform_2, window_bounds = array<i64: 128, 128>}, {transform_indices = @transform_3, window_bounds = array<i64: 1, 128>}, {transform_indices = @transform_4, window_bounds = array<i64: 1, 128>}, {transform_indices = @transform_5, window_bounds = array<i64: 16, 128>}, {transform_indices = @transform_6, window_bounds = array<i64: 16, 128>}]} {
    %c0_i32 = arith.constant 0 : i32
    %0 = arith.cmpi eq, %arg2, %c0_i32 : i32
    %1 = arith.extui %0 : i1 to i32
    %c0_i32_0 = arith.constant 0 : i32
    %2 = arith.cmpi ne, %1, %c0_i32_0 : i32
    scf.if %2 {
      %c0_15 = arith.constant 0 : index
      %c0_16 = arith.constant 0 : index
      %14 = vector.load %arg6[%c0_15, %c0_16] : memref<1x128xf32, #tpu.memory_space<vmem>>, vector<1x128xf32>
      %15 = vector.shape_cast %14 : vector<1x128xf32> to vector<1x128xf32>
      %16 = vector.broadcast %15 : vector<1x128xf32> to vector<16x128xf32>
      %c0_17 = arith.constant 0 : index
      %c0_18 = arith.constant 0 : index
      %17 = vector.load %arg8[%c0_17, %c0_18] : memref<16x128xf32, #tpu.memory_space<vmem>>, vector<16x128xf32>
      tpu.vector_store %arg8[%c0_17, %c0_18], %16 {strides = array<i32>} : memref<16x128xf32, #tpu.memory_space<vmem>>, vector<16x128xf32>,
      %c0_19 = arith.constant 0 : index
      %c0_20 = arith.constant 0 : index
      %18 = vector.load %arg7[%c0_19, %c0_20] : memref<1x128xf32, #tpu.memory_space<vmem>>, vector<1x128xf32>
      %19 = vector.shape_cast %18 : vector<1x128xf32> to vector<1x128xf32>
      %20 = vector.broadcast %19 : vector<1x128xf32> to vector<16x128xf32>
      %c0_21 = arith.constant 0 : index
      %c0_22 = arith.constant 0 : index
      %21 = vector.load %arg9[%c0_21, %c0_22] : memref<16x128xf32, #tpu.memory_space<vmem>>, vector<16x128xf32>
      tpu.vector_store %arg9[%c0_21, %c0_22], %20 {strides = array<i32>} : memref<16x128xf32, #tpu.memory_space<vmem>>, vector<16x128xf32>,
    } else {
    }
    %c0 = arith.constant 0 : index
    %c0_1 = arith.constant 0 : index
    %3 = vector.load %arg3[%c0, %c0_1] : memref<16x128xbf16, #tpu.memory_space<vmem>>, vector<16x128xbf16>
    %c0_2 = arith.constant 0 : index
    %c0_3 = arith.constant 0 : index
    %4 = vector.load %arg8[%c0_2, %c0_3] : memref<16x128xf32, #tpu.memory_space<vmem>>, vector<16x128xf32>
    %c0_4 = arith.constant 0 : index
    %c0_5 = arith.constant 0 : index
    %5 = vector.load %arg4[%c0_4, %c0_5] : memref<128x128xbf16, #tpu.memory_space<vmem>>, vector<128x128xbf16>
    %cst = arith.constant dense<0.000000e+00> : vector<16x128xf32>
    %6 = tpu.matmul %3, %5, %cst {dimension_numbers = #tpu.dot_dimension_numbers<[1], [0], [0], [1], [0, 0, 1, 1], [], []>} : vector<16x128xbf16>, vector<128x128xbf16>, vector<16x128xf32> -> vector<16x128xf32>
    %7 = arith.addf %4, %6 : vector<16x128xf32>
    %c0_6 = arith.constant 0 : index
    %c0_7 = arith.constant 0 : index
    %8 = vector.load %arg8[%c0_6, %c0_7] : memref<16x128xf32, #tpu.memory_space<vmem>>, vector<16x128xf32>
    tpu.vector_store %arg8[%c0_6, %c0_7], %7 {strides = array<i32>} : memref<16x128xf32, #tpu.memory_space<vmem>>, vector<16x128xf32>,
    %c0_8 = arith.constant 0 : index
    %c0_9 = arith.constant 0 : index
    %9 = vector.load %arg9[%c0_8, %c0_9] : memref<16x128xf32, #tpu.memory_space<vmem>>, vector<16x128xf32>
    %c0_10 = arith.constant 0 : index
    %c0_11 = arith.constant 0 : index
    %10 = vector.load %arg5[%c0_10, %c0_11] : memref<128x128xbf16, #tpu.memory_space<vmem>>, vector<128x128xbf16>
    %cst_12 = arith.constant dense<0.000000e+00> : vector<16x128xf32>
    %11 = tpu.matmul %3, %10, %cst_12 {dimension_numbers = #tpu.dot_dimension_numbers<[1], [0], [0], [1], [0, 0, 1, 1], [], []>} : vector<16x128xbf16>, vector<128x128xbf16>, vector<16x128xf32> -> vector<16x128xf32>
    %12 = arith.addf %9, %11 : vector<16x128xf32>
    %c0_13 = arith.constant 0 : index
    %c0_14 = arith.constant 0 : index
    %13 = vector.load %arg9[%c0_13, %c0_14] : memref<16x128xf32, #tpu.memory_space<vmem>>, vector<16x128xf32>
    tpu.vector_store %arg9[%c0_13, %c0_14], %12 {strides = array<i32>} : memref<16x128xf32, #tpu.memory_space<vmem>>, vector<16x128xf32>,
    return
  }
  func.func @transform_0(%arg0: i32, %arg1: i32, %arg2: i32) -> (i32, i32) {
    %c0_i32 = arith.constant 0 : i32
    return %arg0, %arg2 : i32, i32
  }
  func.func @transform_1(%arg0: i32, %arg1: i32, %arg2: i32) -> (i32, i32) {
    %c0_i32 = arith.constant 0 : i32
    return %arg2, %arg1 : i32, i32
  }
  func.func @transform_2(%arg0: i32, %arg1: i32, %arg2: i32) -> (i32, i32) {
    %c0_i32 = arith.constant 0 : i32
    return %arg2, %arg1 : i32, i32
  }
  func.func @transform_3(%arg0: i32, %arg1: i32, %arg2: i32) -> (i32, i32) {
    %c0_i32 = arith.constant 0 : i32
    %c0_i32_0 = arith.constant 0 : i32
    return %c0_i32, %arg1 : i32, i32
  }
  func.func @transform_4(%arg0: i32, %arg1: i32, %arg2: i32) -> (i32, i32) {
    %c0_i32 = arith.constant 0 : i32
    %c0_i32_0 = arith.constant 0 : i32
    return %c0_i32, %arg1 : i32, i32
  }
  func.func @transform_5(%arg0: i32, %arg1: i32, %arg2: i32) -> (i32, i32) {
    %c0_i32 = arith.constant 0 : i32
    return %arg0, %arg1 : i32, i32
  }
  func.func @transform_6(%arg0: i32, %arg1: i32, %arg2: i32) -> (i32, i32) {
    %c0_i32 = arith.constant 0 : i32
    return %arg0, %arg1 : i32, i32
  }
}

</mosaic_0001>

<llo_original>
// kernel: tpu_custom_call.1
$region0: #{tpu_custom_call.1}
  #allocation0 [shape = 'u32[]', space=smem, size = 0x4, offset = 0x4, fixed_abs, tag = 'smem constant byte address 0x4 - core index']
  #allocation1 [shape = 'u32[144,128]{1,0:T(1,128)}', space=vmem, size = 0x12000, scoped, tag = 'internal scratch']
  %s0 = inlined_call_operand.hbm [shape: bf16[16,128], index: 0, kind: input, shape index: {}]
  %s1 = inlined_call_operand.hbm [shape: bf16[128,128], index: 1, kind: input, shape index: {}]
  %s2 = inlined_call_operand.hbm [shape: bf16[128,128], index: 2, kind: input, shape index: {}]
  %s3 = inlined_call_operand.vmem [shape: f32[1,128], index: 3, kind: input, shape index: {}]
  %s4 = inlined_call_operand.vmem [shape: f32[1,128], index: 4, kind: input, shape index: {}]
  %s5 = inlined_call_operand.hbm [shape: f32[16,128], index: 5, kind: output, shape index: {0}]
  %s6 = inlined_call_operand.hbm [shape: f32[16,128], index: 6, kind: output, shape index: {1}]
  %7 = xla_tuple %s5, %s6
  %s8 = sld [smem:[#allocation0]]
  $region54: #{tpu_custom_call.1} parent=0
    _
  %s10 = ssub.s32 1, %s8
  %s11 = scalar_select 0, %s10, %s8
  $region1: #{tpu_custom_call.1} parent=0
    #allocation2 [shape = 'u8[4096]{0}', space=vmem, size = 0x1000, scoped, tag = 'input window, operand 0, single buffered']
    #allocation3 [shape = 's32[1]{0}', space=sflag, size = 0x4, scoped, tag = 'scoped memory for tpu_custom_call.1']
    #allocation4 [shape = 's32[1]{0}', space=sflag, size = 0x4, scoped, tag = 'scoped memory for tpu_custom_call.1']
    #allocation5 [shape = 'u8[32768]{0}', space=vmem, size = 0x8000, scoped, tag = 'input window, operand 1, single buffered']
    #allocation6 [shape = 's32[1]{0}', space=sflag, size = 0x4, scoped, tag = 'scoped memory for tpu_custom_call.1']
    #allocation7 [shape = 'u8[32768]{0}', space=vmem, size = 0x8000, scoped, tag = 'input window, operand 2, single buffered']
    #allocation8 [shape = 'u8[8192]{0}', space=vmem, size = 0x2000, scoped, tag = 'output window, operand 0, single buffered']
    #allocation9 [shape = 'u8[8192]{0}', space=vmem, size = 0x2000, scoped, tag = 'output window, operand 1, single buffered']
    #allocation10 [shape = 's32[1]{0}', space=sflag, size = 0x4, scoped, tag = 'scoped memory for tpu_custom_call.1']
    %12 = vsyncpa [#allocation3], 0
    %13 = vsyncpa [#allocation6], 0
    %14 = vsyncpa [#allocation4], 0
    %15 = vsyncpa [#allocation10], 0
    // Predicated region
    $region2: #{tpu_custom_call.1} parent=1 // pred_check
      _
    $region3: #{tpu_custom_call.1} parent=1 // pred_check_branch
      %17 = sbr.rel (0) target = $region5
    $region4: #{tpu_custom_call.1} parent=1 // pred_region
      %s19 = ssub.s32 128, 128
      %20 = vsyncadd [#allocation3], %s19
      %s21 = sshll.u32 [#allocation2], 4
      %s22 = int_to_ptr.vmem [resolvable:$true] %s21
      %27 = dma.hbm_to_vmem [thread:$0]  %s0, 128, %s22, [#allocation3], 64, 64, 4
    $region5: #{tpu_custom_call.1} parent=1 // pred_fallthru
      _
    // Predicated region
    $region6: #{tpu_custom_call.1} parent=1 // pred_check
      _
    $region7: #{tpu_custom_call.1} parent=1 // pred_check_branch
      %29 = sbr.rel (0) target = $region9
    $region8: #{tpu_custom_call.1} parent=1 // pred_region
      %s31 = ssub.s32 1024, 1024
      %32 = vsyncadd [#allocation6], %s31
      %s33 = sshll.u32 [#allocation5], 4
      %s34 = int_to_ptr.vmem [resolvable:$true] %s33
      %39 = dma.hbm_to_vmem [thread:$0]  %s1, 1024, %s34, [#allocation6], 64, 64, 4
    $region9: #{tpu_custom_call.1} parent=1 // pred_fallthru
      _
    // Predicated region
    $region10: #{tpu_custom_call.1} parent=1 // pred_check
      _
    $region11: #{tpu_custom_call.1} parent=1 // pred_check_branch
      %41 = sbr.rel (0) target = $region13
    $region12: #{tpu_custom_call.1} parent=1 // pred_region
      %s43 = ssub.s32 1024, 1024
      %44 = vsyncadd [#allocation6], %s43
      %s45 = sshll.u32 [#allocation7], 4
      %s46 = int_to_ptr.vmem [resolvable:$true] %s45
      %51 = dma.hbm_to_vmem [thread:$0]  %s2, 1024, %s46, [#allocation6], 64, 64, 4
    $region13: #{tpu_custom_call.1} parent=1 // pred_fallthru
      _
    // Predicated region
    $region14: #{tpu_custom_call.1} parent=1 // pred_check
      _
    $region15: #{tpu_custom_call.1} parent=1 // pred_check_branch
      %53 = sbr.rel (0) target = $region17
    $region16: #{tpu_custom_call.1} parent=1 // pred_region
      _
    $region17: #{tpu_custom_call.1} parent=1 // pred_fallthru
      _
    // Predicated region
    $region18: #{tpu_custom_call.1} parent=1 // pred_check
      _
    $region19: #{tpu_custom_call.1} parent=1 // pred_check_branch
      %55 = sbr.rel (0) target = $region21
    $region20: #{tpu_custom_call.1} parent=1 // pred_region
      _
    $region21: #{tpu_custom_call.1} parent=1 // pred_fallthru
      _
    // Predicated region
    $region22: #{tpu_custom_call.1} parent=1 // pred_check
      _
    $region23: #{tpu_custom_call.1} parent=1 // pred_check_branch
      %57 = sbr.rel (0) target = $region25
    $region24: #{tpu_custom_call.1} parent=1 // pred_region
      %58 = dma.done [#allocation3], 128
    $region25: #{tpu_custom_call.1} parent=1 // pred_fallthru
      _
    // Predicated region
    $region26: #{tpu_custom_call.1} parent=1 // pred_check
      _
    $region27: #{tpu_custom_call.1} parent=1 // pred_check_branch
      %60 = sbr.rel (0) target = $region29
    $region28: #{tpu_custom_call.1} parent=1 // pred_region
      %61 = dma.done [#allocation6], 1024
    $region29: #{tpu_custom_call.1} parent=1 // pred_fallthru
      _
    // Predicated region
    $region30: #{tpu_custom_call.1} parent=1 // pred_check
      _
    $region31: #{tpu_custom_call.1} parent=1 // pred_check_branch
      %63 = sbr.rel (0) target = $region33
    $region32: #{tpu_custom_call.1} parent=1 // pred_region
      %64 = dma.done [#allocation6], 1024
    $region33: #{tpu_custom_call.1} parent=1 // pred_fallthru
      _
    %p66 = scmp.eq.s32.totalorder 0, 0
    // Predicated region
    $region34: #{tpu_custom_call.1} parent=1 // pred_check
      %p67 = pneg %p66
    $region35: #{tpu_custom_call.1} parent=1 // pred_check_branch
      %69 = sbr.rel (%p67) target = $region37
    $region36: #{tpu_custom_call.1} parent=1 // pred_region
      %v70 = vld [vmem:[%s3] sm:$0x1]
      %v72 = vlaneseq
      %v73 = vshrl.u32 %v72, 7
      %v74 = vsub.s32 0, %v73
      %v75 = vrot.slane %v70, %v74
      %77 = vst [vmem:[#allocation8] sm:$0xff] %v75
      %78 = vst [vmem:[#allocation8 + $0x8] sm:$0xff] %v75
      %v79 = vld [vmem:[%s4] sm:$0x1]
      %v81 = vlaneseq
      %v82 = vshrl.u32 %v81, 7
      %v83 = vsub.s32 0, %v82
      %v84 = vrot.slane %v79, %v83
      %86 = vst [vmem:[#allocation9] sm:$0xff] %v84
      %87 = vst [vmem:[#allocation9 + $0x8] sm:$0xff] %v84
    $region37: #{tpu_custom_call.1} parent=1 // pred_fallthru
      _
    %v88 = vld [vmem:[#allocation2] sm:$0xf]
    %v89 = vld [vmem:[#allocation2 + $0x4] sm:$0xf]
    %v90 = vld [vmem:[#allocation8] sm:$0xff]
    %v91 = vld [vmem:[#allocation8 + $0x8] sm:$0xff]
    %v92 = vld [vmem:[#allocation5] sm:$0xf]
    %v93 = vld [vmem:[#allocation5 + $0x4] sm:$0xf]
    %v94 = vld [vmem:[#allocation5 + $0x8] sm:$0xf]
    %v95 = vld [vmem:[#allocation5 + $0xc] sm:$0xf]
    %v96 = vld [vmem:[#allocation5 + $0x10] sm:$0xf]
    %v97 = vld [vmem:[#allocation5 + $0x14] sm:$0xf]
    %v98 = vld [vmem:[#allocation5 + $0x18] sm:$0xf]
    %v99 = vld [vmem:[#allocation5 + $0x1c] sm:$0xf]
    %v100 = vld [vmem:[#allocation5 + $0x20] sm:$0xf]
    %v101 = vld [vmem:[#allocation5 + $0x24] sm:$0xf]
    %v102 = vld [vmem:[#allocation5 + $0x28] sm:$0xf]
    %v103 = vld [vmem:[#allocation5 + $0x2c] sm:$0xf]
    %v104 = vld [vmem:[#allocation5 + $0x30] sm:$0xf]
    %v105 = vld [vmem:[#allocation5 + $0x34] sm:$0xf]
    %v106 = vld [vmem:[#allocation5 + $0x38] sm:$0xf]
    %v107 = vld [vmem:[#allocation5 + $0x3c] sm:$0xf]
    %v110 = vunpack.c.l.b16 %v88
    %v111 = vunpack.c.l.b16 %v89
    %v112 = vpack.c.b16 %v111, %v110
    %v130 = vunpack.c.l.b16 %v92
    %v131 = vunpack.c.l.b16 %v93
    %v132 = vunpack.c.l.b16 %v94
    %v133 = vunpack.c.l.b16 %v95
    %v134 = vunpack.c.l.b16 %v96
    %v135 = vunpack.c.l.b16 %v97
    %v136 = vunpack.c.l.b16 %v98
    %v137 = vunpack.c.l.b16 %v99
    %v138 = vunpack.c.l.b16 %v100
    %v139 = vunpack.c.l.b16 %v101
    %v140 = vunpack.c.l.b16 %v102
    %v141 = vunpack.c.l.b16 %v103
    %v142 = vunpack.c.l.b16 %v104
    %v143 = vunpack.c.l.b16 %v105
    %v144 = vunpack.c.l.b16 %v106
    %v145 = vunpack.c.l.b16 %v107
    %v146 = vpack.c.b16 %v131, %v130
    %v147 = vpack.c.b16 %v133, %v132
    %v148 = vpack.c.b16 %v135, %v134
    %v149 = vpack.c.b16 %v137, %v136
    %v150 = vpack.c.b16 %v139, %v138
    %v151 = vpack.c.b16 %v141, %v140
    %v152 = vpack.c.b16 %v143, %v142
    %v153 = vpack.c.b16 %v145, %v144
    %162 = vmatprep.subr.bf16.mxu0 0
    %163 = vmatpush1.bf16.msra.mxu0 %v153
    %164 = vmatprep.subr.bf16.mxu0 0
    %165 = vmatpush1.bf16.msra.mxu0 %v152
    %166 = vmatprep.subr.bf16.mxu0 0
    %167 = vmatpush1.bf16.msra.mxu0 %v151
    %168 = vmatprep.subr.bf16.mxu0 0
    %169 = vmatpush1.bf16.msra.mxu0 %v150
    %170 = vmatprep.subr.bf16.mxu0 0
    %171 = vmatpush1.bf16.msra.mxu0 %v149
    %172 = vmatprep.subr.bf16.mxu0 0
    %173 = vmatpush1.bf16.msra.mxu0 %v148
    %174 = vmatprep.subr.bf16.mxu0 0
    %175 = vmatpush1.bf16.msra.mxu0 %v147
    %176 = vmatprep.subr.bf16.mxu0 0
    %177 = vmatpush1.bf16.msra.mxu0 %v146
    %178 = vmatprep.subr.bf16.mxu0 0
    %179 = vmatpush2.bf16.msra.mxu0 0
    %180 = vmatprep.subr.bf16.mxu0 0
    %181 = vmatpush2.bf16.msra.mxu0 0
    %182 = vmatprep.subr.bf16.mxu0 0
    %183 = vmatpush2.bf16.msra.mxu0 0
    %184 = vmatprep.subr.bf16.mxu0 0
    %185 = vmatpush2.bf16.msra.mxu0 0
    %186 = vmatprep.subr.bf16.mxu0 0
    %187 = vmatpush2.bf16.msra.mxu0 0
    %188 = vmatprep.subr.bf16.mxu0 0
    %189 = vmatpush2.bf16.msra.mxu0 0
    %190 = vmatprep.subr.bf16.mxu0 0
    %191 = vmatpush2.bf16.msra.mxu0 0
    %192 = vmatprep.subr.bf16.mxu0 0
    %193 = vmatpush2.bf16.msra.mxu0 0
    %194 = vmatprep.mubr.bf16.mxu0 0
    %195 = vmatmul.mubr.bf16.gmra.mxu0 %v112
    %v196 = vpop.f32.mrf.mxu0
    %v197 = vadd.f32 0.0, %v196
    %v198 = vpop.f32.mrf.mxu0
    %v199 = vpop.f32.mrf.mxu0
    %v200 = vadd.f32 0.0, %v199
    %v201 = vpop.f32.mrf.mxu0
    %202 = vdwg.mxu0
    %v203 = vadd.f32 %v90, %v197
    %v204 = vadd.f32 %v91, %v200
    %205 = vst [vmem:[#allocation8] sm:$0xff] %v203
    %206 = vst [vmem:[#allocation8 + $0x8] sm:$0xff] %v204
    %v207 = vld [vmem:[#allocation9] sm:$0xff]
    %v208 = vld [vmem:[#allocation9 + $0x8] sm:$0xff]
    %v209 = vld [vmem:[#allocation7] sm:$0xf]
    %v210 = vld [vmem:[#allocation7 + $0x4] sm:$0xf]
    %v211 = vld [vmem:[#allocation7 + $0x8] sm:$0xf]
    %v212 = vld [vmem:[#allocation7 + $0xc] sm:$0xf]
    %v213 = vld [vmem:[#allocation7 + $0x10] sm:$0xf]
    %v214 = vld [vmem:[#allocation7 + $0x14] sm:$0xf]
    %v215 = vld [vmem:[#allocation7 + $0x18] sm:$0xf]
    %v216 = vld [vmem:[#allocation7 + $0x1c] sm:$0xf]
    %v217 = vld [vmem:[#allocation7 + $0x20] sm:$0xf]
    %v218 = vld [vmem:[#allocation7 + $0x24] sm:$0xf]
    %v219 = vld [vmem:[#allocation7 + $0x28] sm:$0xf]
    %v220 = vld [vmem:[#allocation7 + $0x2c] sm:$0xf]
    %v221 = vld [vmem:[#allocation7 + $0x30] sm:$0xf]
    %v222 = vld [vmem:[#allocation7 + $0x34] sm:$0xf]
    %v223 = vld [vmem:[#allocation7 + $0x38] sm:$0xf]
    %v224 = vld [vmem:[#allocation7 + $0x3c] sm:$0xf]
    %v241 = vunpack.c.l.b16 %v209
    %v242 = vunpack.c.l.b16 %v210
    %v243 = vunpack.c.l.b16 %v211
    %v244 = vunpack.c.l.b16 %v212
    %v245 = vunpack.c.l.b16 %v213
    %v246 = vunpack.c.l.b16 %v214
    %v247 = vunpack.c.l.b16 %v215
    %v248 = vunpack.c.l.b16 %v216
    %v249 = vunpack.c.l.b16 %v217
    %v250 = vunpack.c.l.b16 %v218
    %v251 = vunpack.c.l.b16 %v219
    %v252 = vunpack.c.l.b16 %v220
    %v253 = vunpack.c.l.b16 %v221
    %v254 = vunpack.c.l.b16 %v222
    %v255 = vunpack.c.l.b16 %v223
    %v256 = vunpack.c.l.b16 %v224
    %v257 = vpack.c.b16 %v242, %v241
    %v258 = vpack.c.b16 %v244, %v243
    %v259 = vpack.c.b16 %v246, %v245
    %v260 = vpack.c.b16 %v248, %v247
    %v261 = vpack.c.b16 %v250, %v249
    %v262 = vpack.c.b16 %v252, %v251
    %v263 = vpack.c.b16 %v254, %v253
    %v264 = vpack.c.b16 %v256, %v255
    %273 = vmatprep.subr.bf16.mxu0 0
    %274 = vmatpush1.bf16.msra.mxu0 %v264
    %275 = vmatprep.subr.bf16.mxu0 0
    %276 = vmatpush1.bf16.msra.mxu0 %v263
    %277 = vmatprep.subr.bf16.mxu0 0
    %278 = vmatpush1.bf16.msra.mxu0 %v262
    %279 = vmatprep.subr.bf16.mxu0 0
    %280 = vmatpush1.bf16.msra.mxu0 %v261
    %281 = vmatprep.subr.bf16.mxu0 0
    %282 = vmatpush1.bf16.msra.mxu0 %v260
    %283 = vmatprep.subr.bf16.mxu0 0
    %284 = vmatpush1.bf16.msra.mxu0 %v259
    %285 = vmatprep.subr.bf16.mxu0 0
    %286 = vmatpush1.bf16.msra.mxu0 %v258
    %287 = vmatprep.subr.bf16.mxu0 0
    %288 = vmatpush1.bf16.msra.mxu0 %v257
    %289 = vmatprep.subr.bf16.mxu0 0
    %290 = vmatpush2.bf16.msra.mxu0 0
    %291 = vmatprep.subr.bf16.mxu0 0
    %292 = vmatpush2.bf16.msra.mxu0 0
    %293 = vmatprep.subr.bf16.mxu0 0
    %294 = vmatpush2.bf16.msra.mxu0 0
    %295 = vmatprep.subr.bf16.mxu0 0
    %296 = vmatpush2.bf16.msra.mxu0 0
    %297 = vmatprep.subr.bf16.mxu0 0
    %298 = vmatpush2.bf16.msra.mxu0 0
    %299 = vmatprep.subr.bf16.mxu0 0
    %300 = vmatpush2.bf16.msra.mxu0 0
    %301 = vmatprep.subr.bf16.mxu0 0
    %302 = vmatpush2.bf16.msra.mxu0 0
    %303 = vmatprep.subr.bf16.mxu0 0
    %304 = vmatpush2.bf16.msra.mxu0 0
    %305 = vmatprep.mubr.bf16.mxu0 0
    %306 = vmatmul.mubr.bf16.gmra.mxu0 %v112
    %v307 = vpop.f32.mrf.mxu0
    %v308 = vadd.f32 0.0, %v307
    %v309 = vpop.f32.mrf.mxu0
    %v310 = vpop.f32.mrf.mxu0
    %v311 = vadd.f32 0.0, %v310
    %v312 = vpop.f32.mrf.mxu0
    %313 = vdwg.mxu0
    %v314 = vadd.f32 %v207, %v308
    %v315 = vadd.f32 %v208, %v311
    %316 = vst [vmem:[#allocation9] sm:$0xff] %v314
    %317 = vst [vmem:[#allocation9 + $0x8] sm:$0xff] %v315
    // Predicated region
    $region38: #{tpu_custom_call.1} parent=1 // pred_check
      _
    $region39: #{tpu_custom_call.1} parent=1 // pred_check_branch
      %319 = sbr.rel (0) target = $region41
    $region40: #{tpu_custom_call.1} parent=1 // pred_region
      %s321 = ssub.s32 256, 256
      %322 = vsyncadd [#allocation4], %s321
      %s323 = sshll.u32 [#allocation8], 4
      %s324 = int_to_ptr.vmem [resolvable:$true] %s323
      %329 = dma.vmem_to_hbm [thread:$0]  %s324, 256, %s5, [#allocation4], 128, 128, 8
    $region41: #{tpu_custom_call.1} parent=1 // pred_fallthru
      _
    // Predicated region
    $region42: #{tpu_custom_call.1} parent=1 // pred_check
      _
    $region43: #{tpu_custom_call.1} parent=1 // pred_check_branch
      %331 = sbr.rel (0) target = $region45
    $region44: #{tpu_custom_call.1} parent=1 // pred_region
      %s333 = ssub.s32 256, 256
      %334 = vsyncadd [#allocation10], %s333
      %s335 = sshll.u32 [#allocation9], 4
      %s336 = int_to_ptr.vmem [resolvable:$true] %s335
      %341 = dma.vmem_to_hbm [thread:$0]  %s336, 256, %s6, [#allocation10], 128, 128, 8
    $region45: #{tpu_custom_call.1} parent=1 // pred_fallthru
      _
    // Predicated region
    $region46: #{tpu_custom_call.1} parent=1 // pred_check
      _
    $region47: #{tpu_custom_call.1} parent=1 // pred_check_branch
      %343 = sbr.rel (0) target = $region49
    $region48: #{tpu_custom_call.1} parent=1 // pred_region
      %344 = dma.done [#allocation4], 256
    $region49: #{tpu_custom_call.1} parent=1 // pred_fallthru
      _
    // Predicated region
    $region50: #{tpu_custom_call.1} parent=1 // pred_check
      _
    $region51: #{tpu_custom_call.1} parent=1 // pred_check_branch
      %346 = sbr.rel (0) target = $region53
    $region52: #{tpu_custom_call.1} parent=1 // pred_region
      %347 = dma.done [#allocation10], 256
    $region53: #{tpu_custom_call.1} parent=1 // pred_fallthru
      _
    %348 = vsyncpa [#allocation3], 1
    %349 = vsyncpa [#allocation6], 1
    %350 = vsyncpa [#allocation4], 1
    %351 = vsyncpa [#allocation10], 1

</llo_original>
